<compile_context>
chip_gen: v5e
topology: v5e:2x2
jax: 0.10.0
libtpu: 0.0.40
codegen_flags: <defaults>
</compile_context>

<pallas_src>
import functools

import jax
import jax.numpy as jnp
from jax.experimental import pallas as pl
from jax.experimental.pallas import tpu as pltpu


def _sum_pool_kernel(x_ref, pw_ref, o_ref, *, kernel_size: int, stride: int,
                     out_rows: int):
    # x_ref : (bt, in_h, W)      input band (batch*channel fused on dim 0)
    # pw_ref: (W, out_w)         constant 0/1 pooling matrix (f32)
    # o_ref : (bt, out_rows, out_w)

    def band(di):
        if stride > 1:
            idx = pl.ds(di, out_rows, stride=stride)
        else:
            idx = pl.ds(di, out_rows)
        # Strided load straight from the Ref (sublane axis): no full-block
        # f32 temporary is materialized.
        return x_ref[:, idx, :].astype(jnp.float32)

    rows = band(0)
    for di in range(1, kernel_size):
        rows = rows + band(di)          # (bt, out_rows, W), f32

    bt = o_ref.shape[0]
    pw = pw_ref[...]                                       # (W, out_w)
    pw_b = jnp.broadcast_to(pw[None], (bt,) + pw.shape)    # (bt, W, out_w)
    out = jnp.einsum("bhw,bwo->bho", rows, pw_b,
                     preferred_element_type=jnp.float32)   # MXU
    o_ref[...] = out.astype(o_ref.dtype)


def _budgets():
    """(target block bytes, vmem_limit_bytes) keyed off the chip's VMEM size."""
    vmem_cap = 64 * 1024 * 1024  # conservative default (v7x-class)
    try:
        info = pltpu.get_tpu_info()
        vmem_cap = getattr(info, "vmem_capacity_bytes", vmem_cap)
    except Exception:
        pass
    if vmem_cap <= 64 * 1024 * 1024:          # v7x: 64 MiB physical VMEM
        return 4 * 1024 * 1024, 40 * 1024 * 1024
    return 8 * 1024 * 1024, 80 * 1024 * 1024  # v5e / v6e: 128 MiB VMEM


def sum_pool_2d(x: jax.Array, kernel_size: int, stride: int) -> jax.Array:
    """Sum pooling over kernel_size x kernel_size windows with given stride.

    x: (N, C, H, W) -> (N, C, Ho, Wo),  Ho = (H - k)//stride + 1.
    Accumulation is in f32 and cast back to x.dtype (documented ULP-level
    difference vs. pure input-dtype accumulation for narrow dtypes).
    """
    n, c, h, w = x.shape
    out_h = (h - kernel_size) // stride + 1
    out_w = (w - kernel_size) // stride + 1
    itemsize = jnp.dtype(x.dtype).itemsize

    nc = n * c
    xr = x.reshape(nc, h, w)          # free reshape: collapses leading dims

    target_bytes, vmem_limit = _budgets()
    slice_bytes = h * w * itemsize

    # ---- nc (batch*channel) tiling -------------------------------------
    if slice_bytes >= target_bytes:
        bt = 1
    else:
        bt = max(1, min(nc, target_bytes // max(slice_bytes, 1)))
        # bound the in-kernel batched matmul / broadcast size
        bt = min(bt, 256, max(1, (2 * 1024 * 1024) // max(w * out_w * 4, 1)))
    if nc >= 2 and bt >= nc:
        bt = pl.cdiv(nc, 2)           # expose >=2 parallel steps (v7x megacore)
    num_nc = pl.cdiv(nc, bt)

    # ---- H banding (only when a single (H, W) slice exceeds the budget and
    #      windows do not overlap along H, i.e. stride >= kernel_size) -----
    sub = {4: 8, 2: 16, 1: 32}.get(itemsize, 8)   # sublane multiple per dtype
    band_out = out_h
    in_band_h = h
    num_hb = 1
    if slice_bytes > target_bytes and stride >= kernel_size and out_h >= 2 * sub:
        rows_in_target = max(sub * stride, target_bytes // max(w * itemsize, 1))
        cand = max(sub, ((rows_in_target // stride) // sub) * sub)
        if cand < out_h:
            band_out = cand
            in_band_h = band_out * stride
            num_hb = pl.cdiv(out_h, band_out)
    # TODO(synk): for overlapping windows (stride < kernel_size) on very large
    # images, add an element-indexed (haloed) input map instead of a full-H block.

    # Constant 0/1 pooling matrix for the W (lane) axis: P[w, ow] = 1 iff
    # ow*stride <= w < ow*stride + kernel_size.
    w_idx = jnp.arange(w)[:, None]
    starts = (jnp.arange(out_w) * stride)[None, :]
    pw = ((w_idx >= starts) & (w_idx < starts + kernel_size)).astype(jnp.float32)

    kernel = functools.partial(_sum_pool_kernel, kernel_size=kernel_size,
                               stride=stride, out_rows=band_out)

    cost = pl.CostEstimate(
        flops=nc * out_h * ((kernel_size - 1) * w + 2 * w * out_w),
        transcendentals=0,
        bytes_accessed=nc * (h * w + out_h * out_w) * itemsize,
    )

    out = pl.pallas_call(
        kernel,
        out_shape=jax.ShapeDtypeStruct((nc, out_h, out_w), x.dtype),
        grid_spec=pltpu.PrefetchScalarGridSpec(
            num_scalar_prefetch=0,
            grid=(num_nc, num_hb),
            in_specs=[
                pl.BlockSpec((bt, in_band_h, w), lambda i, j: (i, j, 0)),
                pl.BlockSpec((w, out_w), lambda i, j: (0, 0)),
            ],
            out_specs=pl.BlockSpec((bt, band_out, out_w),
                                   lambda i, j: (i, j, 0)),
        ),
        compiler_params=pltpu.CompilerParams(
            dimension_semantics=("parallel", "parallel"),
            vmem_limit_bytes=vmem_limit,
        ),
        cost_estimate=cost,
    )(xr, pw)

    return out.reshape(n, c, out_h, out_w)   # free reshape back to NCHW


if __name__ == "__main__":
    kernel_size = 2
    stride = 2

    key = jax.random.PRNGKey(0)
    x = jax.random.normal(key, (2, 4, 16, 16), dtype=jnp.float32)

    out = jax.block_until_ready(sum_pool_2d(x, kernel_size, stride))

    ref = jax.lax.reduce_window(
        x, jnp.asarray(0.0, x.dtype), jax.lax.add,
        window_dimensions=(1, 1, kernel_size, kernel_size),
        window_strides=(1, 1, stride, stride),
        padding="VALID")

    assert out.shape == (2, 4, 8, 8), out.shape
    assert jnp.allclose(out, ref, atol=1e-5, rtol=1e-5), (
        float(jnp.max(jnp.abs(out - ref))))

    print("KERNEL_OK")
</pallas_src>

<mosaic_0001>
module attributes {stable_mosaic.version = 11 : i64} {
  func.func @_sum_pool_kernel(%arg0: i32, %arg1: i32, %arg2: memref<4x16x16xf32, #tpu.memory_space<vmem>>, %arg3: memref<16x8xf32, #tpu.memory_space<vmem>>, %arg4: memref<4x8x8xf32, #tpu.memory_space<vmem>>) attributes {dimension_semantics = [#tpu.dimension_semantics<parallel>, #tpu.dimension_semantics<parallel>], iteration_bounds = array<i64: 2, 1>, scalar_prefetch = 0 : i64, scratch_operands = 0 : i64, tpu.core_type = #tpu.core_type<tc>, window_params = [{transform_indices = @transform_0, window_bounds = array<i64: 4, 16, 16>}, {pipeline_mode = #tpu.pipeline_mode<synchronous>, transform_indices = @transform_1, window_bounds = array<i64: 16, 8>}, {transform_indices = @transform_2, window_bounds = array<i64: 4, 8, 8>}]} {
    %c0 = arith.constant 0 : index
    %c0_0 = arith.constant 0 : index
    %c0_1 = arith.constant 0 : index
    %0 = tpu.strided_load %arg2[%c0, %c0_0, %c0_1] {strides = array<i32: 1, 2, 1>} : memref<4x16x16xf32, #tpu.memory_space<vmem>>, vector<4x8x16xf32>
    %c0_2 = arith.constant 0 : index
    %c1 = arith.constant 1 : index
    %c0_3 = arith.constant 0 : index
    %1 = tpu.strided_load %arg2[%c0_2, %c1, %c0_3] {strides = array<i32: 1, 2, 1>} : memref<4x16x16xf32, #tpu.memory_space<vmem>>, vector<4x8x16xf32>
    %2 = arith.addf %0, %1 : vector<4x8x16xf32>
    %c0_4 = arith.constant 0 : index
    %c0_5 = arith.constant 0 : index
    %3 = vector.load %arg3[%c0_4, %c0_5] : memref<16x8xf32, #tpu.memory_space<vmem>>, vector<16x8xf32>
    %4 = vector.shape_cast %3 : vector<16x8xf32> to vector<1x16x8xf32>
    %5 = vector.shape_cast %4 : vector<1x16x8xf32> to vector<1x16x8xf32>
    %6 = vector.broadcast %5 : vector<1x16x8xf32> to vector<4x16x8xf32>
    "tpu.trace_start"() <{level = 10 : i32, message = "bhw,bwo->bho"}> : () -> ()
    %cst = arith.constant dense<0.000000e+00> : vector<4x8x8xf32>
    %7 = tpu.matmul %2, %6, %cst {dimension_numbers = #tpu.dot_dimension_numbers<[2], [1], [1], [2], [0, 0, 0, 1, 1, 2], [0], [0]>} : vector<4x8x16xf32>, vector<4x16x8xf32>, vector<4x8x8xf32> -> vector<4x8x8xf32>
    "tpu.trace_stop"() : () -> ()
    %c0_6 = arith.constant 0 : index
    %c0_7 = arith.constant 0 : index
    %c0_8 = arith.constant 0 : index
    %8 = vector.load %arg4[%c0_6, %c0_7, %c0_8] : memref<4x8x8xf32, #tpu.memory_space<vmem>>, vector<4x8x8xf32>
    tpu.vector_store %arg4[%c0_6, %c0_7, %c0_8], %7 {strides = array<i32>} : memref<4x8x8xf32, #tpu.memory_space<vmem>>, vector<4x8x8xf32>,
    return
  }
  func.func @transform_0(%arg0: i32, %arg1: i32) -> (i32, i32, i32) {
    %c0_i32 = arith.constant 0 : i32
    %c0_i32_0 = arith.constant 0 : i32
    return %arg0, %arg1, %c0_i32 : i32, i32, i32
  }
  func.func @transform_1(%arg0: i32, %arg1: i32) -> (i32, i32) {
    %c0_i32 = arith.constant 0 : i32
    %c0_i32_0 = arith.constant 0 : i32
    %c0_i32_1 = arith.constant 0 : i32
    return %c0_i32, %c0_i32_0 : i32, i32
  }
  func.func @transform_2(%arg0: i32, %arg1: i32) -> (i32, i32, i32) {
    %c0_i32 = arith.constant 0 : i32
    %c0_i32_0 = arith.constant 0 : i32
    return %arg0, %arg1, %c0_i32 : i32, i32, i32
  }
}

</mosaic_0001>

<llo_original>
// kernel: tpu_custom_call.1
$region0: #{tpu_custom_call.1}
  #allocation0 [shape = 'u32[]', space=smem, size = 0x4, offset = 0x4, fixed_abs, tag = 'smem constant byte address 0x4 - core index']
  #allocation1 [shape = 'u32[72,128]{1,0:T(1,128)}', space=vmem, size = 0x9000, scoped, tag = 'internal scratch']
  %s0 = inlined_call_operand.hbm [shape: f32[8,16,16], index: 0, kind: input, shape index: {}]
  %s1 = inlined_call_operand.vmem [shape: f32[16,8], index: 1, kind: input, shape index: {}]
  %s2 = inlined_call_operand.hbm [shape: f32[8,8,8], index: 2, kind: output, shape index: {}]
  %s3 = sld [smem:[#allocation0]]
  $region45: #{tpu_custom_call.1} parent=0
    _
  %s5 = ssub.s32 1, %s3
  %s6 = scalar_select 0, %s5, %s3
  $region1: #{tpu_custom_call.1} parent=0
    #allocation2 [shape = 'u8[65536]{0}', space=vmem, size = 0x10000, scoped, tag = 'input window, operand 0']
    #allocation3 [shape = 's32[2]{0}', space=sflag, size = 0x8, scoped, tag = 'scoped memory for tpu_custom_call.1']
    #allocation4 [shape = 's32[2]{0}', space=sflag, size = 0x8, scoped, tag = 'scoped memory for tpu_custom_call.1']
    #allocation5 [shape = 'u8[32768]{0}', space=vmem, size = 0x8000, scoped, tag = 'output window, operand 0']
    %7 = vsyncpa [#allocation3], 0
    %s8 = scalar_lea.sflag [#allocation3], 1
    %9 = vsyncpa %s8, 0
    %10 = vsyncpa [#allocation4], 0
    %s11 = scalar_lea.sflag [#allocation4], 1
    %12 = vsyncpa %s11, 0
    loop: start=0, step=1, limit=4
    $region2: #{tpu_custom_call.1} parent=1 // loop_pre_header
      _
    $region3: #{tpu_custom_call.1} parent=1 // loop_header
      %s14 = sphi 0, %s18
      %p15 = scmp.ge.s32.totalorder %s14, 4
      %s21 = sphi 0, %s33
      %s22 = sphi 0, %s29
      %s23 = sphi 0, %s21
      %s24 = sphi 0, %s22
      %s25 = sphi 0, %s23
      %s26 = sphi 0, %s24
      %s38 = sphi 0, %s40
      %s41 = sphi 0, %s38
      %s42 = sphi 0, %s41
      %s58 = sphi 0, %s42
      %s62 = sphi 0, %s62
      %s64 = sphi 0, %s62
      %s65 = sphi 0, %s64
      %s79 = sphi 0, %s65
      %s87 = sphi 0, %s89
      %s90 = sphi 0, %s87
      %s91 = sphi 0, %s90
      %s107 = sphi 0, %s91
    $region4: #{tpu_custom_call.1} parent=1 // loop_header_branch
      %17 = sbr.rel (%p15) target = $region8
    $region5: #{tpu_custom_call.1} parent=1 // loop_body
      %s19 = ssub.s32 %s14, 1
      %s20 = ssub.s32 %s14, 2
      %s27 = sadd.s32 1, %s22
      %p28 = scmp.ge.s32.totalorder %s27, 1
      %s29 = scalar_select %p28, 0, %s27
      %s30 = sadd.s32 1, %s21
      %s31 = scalar_select %p28, %s30, %s21
      %p32 = scmp.ge.s32.totalorder %s31, 2
      %s33 = scalar_select %p32, 0, %s31
      %s34 = ssub.s32 %s21, %s33
      %s35 = ssub.s32 %s22, %s29
      %s36 = sor.u32 %s34, %s35
      %p37 = scmp.eq.s32.totalorder %s36, 0
      %s39 = sadd.s32 %s38, 1
      %s40 = scalar_select %p37, %s38, %s39
      %p43 = pneg %p37
      %p44 = scmp.eq.s32.totalorder %s14, 1
      %p45 = por %p43, %p44
      %p46 = scmp.ne.s32.totalorder %s38, %s41
      %p47 = scmp.eq.s32.totalorder %s14, 0
      %p48 = por %p46, %p47
      %p49 = scmp.ne.s32.totalorder %s38, %s41
      %p50 = scmp.eq.s32.totalorder %s19, 1
      %p51 = por %p49, %p50
      %p52 = scmp.ne.s32.totalorder %s41, %s42
      %p53 = scmp.eq.s32.totalorder %s19, 0
      %p54 = por %p52, %p53
      %p55 = scmp.ne.s32.totalorder %s41, %s42
      %p56 = scmp.eq.s32.totalorder %s20, 1
      %p57 = por %p55, %p56
      %p59 = scmp.ne.s32.totalorder %s42, %s58
      %p60 = scmp.eq.s32.totalorder %s20, 0
      %p61 = por %p59, %p60
      %s63 = sadd.s32 %s62, 1
      %p66 = scmp.eq.s32.totalorder %s14, 1
      %p67 = scmp.ne.s32.totalorder %s62, %s64
      %p68 = scmp.eq.s32.totalorder %s14, 0
      %p69 = por %p67, %p68
      %p70 = scmp.ne.s32.totalorder %s62, %s64
      %p71 = scmp.eq.s32.totalorder %s19, 1
      %p72 = por %p70, %p71
      %p73 = scmp.ne.s32.totalorder %s64, %s65
      %p74 = scmp.eq.s32.totalorder %s19, 0
      %p75 = por %p73, %p74
      %p76 = scmp.ne.s32.totalorder %s64, %s65
      %p77 = scmp.eq.s32.totalorder %s20, 1
      %p78 = por %p76, %p77
      %p80 = scmp.ne.s32.totalorder %s65, %s79
      %p81 = scmp.eq.s32.totalorder %s20, 0
      %p82 = por %p80, %p81
      %s83 = ssub.s32 %s21, %s33
      %s84 = ssub.s32 %s22, %s29
      %s85 = sor.u32 %s83, %s84
      %p86 = scmp.eq.s32.totalorder %s85, 0
      %s88 = sadd.s32 %s87, 1
      %s89 = scalar_select %p86, %s87, %s88
      %p92 = pneg %p86
      %p93 = scmp.eq.s32.totalorder %s14, 1
      %p94 = por %p92, %p93
      %p95 = scmp.ne.s32.totalorder %s87, %s90
      %p96 = scmp.eq.s32.totalorder %s14, 0
      %p97 = por %p95, %p96
      %p98 = scmp.ne.s32.totalorder %s87, %s90
      %p99 = scmp.eq.s32.totalorder %s19, 1
      %p100 = por %p98, %p99
      %p101 = scmp.ne.s32.totalorder %s90, %s91
      %p102 = scmp.eq.s32.totalorder %s19, 0
      %p103 = por %p101, %p102
      %p104 = scmp.ne.s32.totalorder %s90, %s91
      %p105 = scmp.eq.s32.totalorder %s20, 1
      %p106 = por %p104, %p105
      %p108 = scmp.ne.s32.totalorder %s91, %s107
      %p109 = scmp.eq.s32.totalorder %s20, 0
      %p110 = por %p108, %p109
      %p111 = scmp.le.s32.totalorder 1, %s14
      %p112 = scmp.lt.s32.totalorder %s14, 3
      %p113 = pnand %p111, %p112
      %p114 = pneg %p113
      // Predicated region
      $region9: #{tpu_custom_call.1} parent=5 // pred_check
        _
      $region10: #{tpu_custom_call.1} parent=5 // pred_check_branch
        %116 = sbr.rel (%p113) target = $region12
      $region11: #{tpu_custom_call.1} parent=5 // pred_region
        %s117 = ssub.s32 %s14, 1
        // Predicated region
        $region13: #{tpu_custom_call.1} parent=11 // pred_check
          %p118 = pneg %p75
        $region14: #{tpu_custom_call.1} parent=11 // pred_check_branch
          %120 = sbr.rel (%p118) target = $region16
        $region15: #{tpu_custom_call.1} parent=11 // pred_region
          _
        $region16: #{tpu_custom_call.1} parent=11 // pred_fallthru
          _
      $region12: #{tpu_custom_call.1} parent=5 // pred_fallthru
        _
      %p121 = scmp.lt.s32.totalorder %s14, 2
      // Predicated region
      $region17: #{tpu_custom_call.1} parent=5 // pred_check
        %p122 = pneg %p121
      $region18: #{tpu_custom_call.1} parent=5 // pred_check_branch
        %124 = sbr.rel (%p122) target = $region20
      $region19: #{tpu_custom_call.1} parent=5 // pred_region
        // Predicated region
        $region21: #{tpu_custom_call.1} parent=19 // pred_check
          %p125 = pneg %p48
        $region22: #{tpu_custom_call.1} parent=19 // pred_check_branch
          %127 = sbr.rel (%p125) target = $region24
        $region23: #{tpu_custom_call.1} parent=19 // pred_region
          %s128 = sand.u32 %s38, 1
          %s129 = scalar_lea.sflag [#allocation3], %s128
          %s130 = sand.u32 %s38, 1
          %s131 = smul.addr %s130, 64
          %s132 = scalar_lea.vmem [#allocation2], %s131
          %s133 = smul.u32 4, %s21
          %s134 = smul.u32 2, %s22
          %136 = vsyncadd %s129, 0
          %s137 = smul.addr %s133, 2
          %s138 = sadd.s32 %s134, %s137
          %s139 = smul.addr %s138, 8
          %s140 = scalar_lea.hbm %s0, %s139
          %s141 = sshll.u32 %s140, 4
          %s142 = int_to_ptr.hbm [resolvable:$true] %s141
          %s143 = sshll.u32 %s132, 4
          %s144 = int_to_ptr.vmem [resolvable:$true] %s143
          %149 = dma.hbm_to_vmem [thread:$0]  %s142, 1024, %s144, %s129, 128, 128, 8
        $region24: #{tpu_custom_call.1} parent=19 // pred_fallthru
          _
      $region20: #{tpu_custom_call.1} parent=5 // pred_fallthru
        _
      %p150 = scmp.le.s32.totalorder 1, %s14
      %p151 = scmp.lt.s32.totalorder %s14, 3
      %p152 = pnand %p150, %p151
      %p153 = pneg %p152
      // Predicated region
      $region25: #{tpu_custom_call.1} parent=5 // pred_check
        _
      $region26: #{tpu_custom_call.1} parent=5 // pred_check_branch
        %155 = sbr.rel (%p152) target = $region28
      $region27: #{tpu_custom_call.1} parent=5 // pred_region
        %s156 = ssub.s32 %s14, 1
        %s157 = sand.u32 %s41, 1
        %s158 = scalar_lea.sflag [#allocation3], %s157
        %s159 = sand.u32 %s41, 1
        %s160 = smul.addr %s159, 64
        %s161 = scalar_lea.vmem [#allocation2], %s160
        // Predicated region
        $region29: #{tpu_custom_call.1} parent=27 // pred_check
          %p162 = pneg %p54
        $region30: #{tpu_custom_call.1} parent=27 // pred_check_branch
          %164 = sbr.rel (%p162) target = $region32
        $region31: #{tpu_custom_call.1} parent=27 // pred_region
          %166 = dma.done %s158, 1024
        $region32: #{tpu_custom_call.1} parent=27 // pred_fallthru
          _
        %s167 = sand.u32 %s41, 1
        %s168 = scalar_lea.sflag [#allocation3], %s167
        %s169 = sand.u32 %s41, 1
        %s170 = smul.addr %s169, 64
        %s171 = scalar_lea.vmem [#allocation2], %s170
        %p172 = pneg %p54
        %p173 = pneg %p51
        %p174 = pneg %p75
        %p175 = pneg %p72
        %p176 = pneg %p103
        %p177 = pneg %p100
        %s178 = sand.u32 %s90, 1
        %s179 = scalar_lea.sflag [#allocation4], %s178
        %s180 = sand.u32 %s90, 1
        %s181 = smul.addr %s180, 32
        %s182 = scalar_lea.vmem [#allocation5], %s181
        %s183 = smul.u32 4, %s23
        %s184 = smul.u32 2, %s24
        %s185 = smul.u32 4, %s23
        %v186 = vld [vmem:[%s161] ss:$2 sm:$0xff]
        %s187 = scalar_lea.vmem %s161, 16 [#allocation2]
        %v188 = vld [vmem:[%s187] ss:$2 sm:$0xff]
        %s189 = scalar_lea.vmem %s161, 32 [#allocation2]
        %v190 = vld [vmem:[%s189] ss:$2 sm:$0xff]
        %s191 = scalar_lea.vmem %s161, 48 [#allocation2]
        %v192 = vld [vmem:[%s191] ss:$2 sm:$0xff]
        %s193 = scalar_lea.vmem %s161, 1 [#allocation2]
        %v194 = vld [vmem:[%s193] ss:$2 sm:$0xff]
        %s195 = scalar_lea.vmem %s161, 17 [#allocation2]
        %v196 = vld [vmem:[%s195] ss:$2 sm:$0xff]
        %s197 = scalar_lea.vmem %s161, 33 [#allocation2]
        %v198 = vld [vmem:[%s197] ss:$2 sm:$0xff]
        %s199 = scalar_lea.vmem %s161, 49 [#allocation2]
        %v200 = vld [vmem:[%s199] ss:$2 sm:$0xff]
        %v201 = vadd.f32 %v186, %v194
        %v202 = vadd.f32 %v188, %v196
        %v203 = vadd.f32 %v190, %v198
        %v204 = vadd.f32 %v192, %v200
        %v205 = vld [vmem:[%s1] sm:$0xff]
        %v206 = vld [vmem:[%s1 + $0x8] sm:$0xff]
        %vm207 = vcmask 130048
        %v209 = vsel %vm207, %v201, 0
        %211 = vmatpush.msra.mxu0 0.0
        %212 = vmatpush.msra.mxu0 0.0
        %213 = vmatpush.msra.mxu0 0.0
        %214 = vmatpush.msra.mxu0 0.0
        %215 = vmatpush.msra.mxu0 0.0
        %216 = vmatpush.msra.mxu0 0.0
        %217 = vmatpush.msra.mxu0 0.0
        %218 = vmatpush.msra.mxu0 0.0
        %219 = vmatpush.msra.mxu0 0.0
        %220 = vmatpush.msra.mxu0 0.0
        %221 = vmatpush.msra.mxu0 0.0
        %222 = vmatpush.msra.mxu0 0.0
        %223 = vmatpush.msra.mxu0 0.0
        %224 = vmatpush.msra.mxu0 0.0
        %225 = vmatpush.msra.mxu0 %v206
        %226 = vmatpush.msra.mxu0 %v205
        %227 = vmatmul.f32.gmra.mxu0 %v209
        %v228 = vpop.f32.mrf.mxu0
        %v229 = vadd.f32 0.0, %v228
        %230 = vdwg.mxu0
        %v232 = vsel %vm207, %v202, 0
        %234 = vmatpush.msra.mxu0 0.0
        %235 = vmatpush.msra.mxu0 0.0
        %236 = vmatpush.msra.mxu0 0.0
        %237 = vmatpush.msra.mxu0 0.0
        %238 = vmatpush.msra.mxu0 0.0
        %239 = vmatpush.msra.mxu0 0.0
        %240 = vmatpush.msra.mxu0 0.0
        %241 = vmatpush.msra.mxu0 0.0
        %242 = vmatpush.msra.mxu0 0.0
        %243 = vmatpush.msra.mxu0 0.0
        %244 = vmatpush.msra.mxu0 0.0
        %245 = vmatpush.msra.mxu0 0.0
        %246 = vmatpush.msra.mxu0 0.0
        %247 = vmatpush.msra.mxu0 0.0
        %248 = vmatpush.msra.mxu0 %v206
        %249 = vmatpush.msra.mxu0 %v205
        %250 = vmatmul.f32.gmra.mxu0 %v232
        %v251 = vpop.f32.mrf.mxu0
        %v252 = vadd.f32 0.0, %v251
        %253 = vdwg.mxu0
        %v255 = vsel %vm207, %v203, 0
        %257 = vmatpush.msra.mxu0 0.0
        %258 = vmatpush.msra.mxu0 0.0
        %259 = vmatpush.msra.mxu0 0.0
        %260 = vmatpush.msra.mxu0 0.0
        %261 = vmatpush.msra.mxu0 0.0
        %262 = vmatpush.msra.mxu0 0.0
        %263 = vmatpush.msra.mxu0 0.0
        %264 = vmatpush.msra.mxu0 0.0
        %265 = vmatpush.msra.mxu0 0.0
        %266 = vmatpush.msra.mxu0 0.0
        %267 = vmatpush.msra.mxu0 0.0
        %268 = vmatpush.msra.mxu0 0.0
        %269 = vmatpush.msra.mxu0 0.0
        %270 = vmatpush.msra.mxu0 0.0
        %271 = vmatpush.msra.mxu0 %v206
        %272 = vmatpush.msra.mxu0 %v205
        %273 = vmatmul.f32.gmra.mxu0 %v255
        %v274 = vpop.f32.mrf.mxu0
        %v275 = vadd.f32 0.0, %v274
        %276 = vdwg.mxu0
        %v278 = vsel %vm207, %v204, 0
        %280 = vmatpush.msra.mxu0 0.0
        %281 = vmatpush.msra.mxu0 0.0
        %282 = vmatpush.msra.mxu0 0.0
        %283 = vmatpush.msra.mxu0 0.0
        %284 = vmatpush.msra.mxu0 0.0
        %285 = vmatpush.msra.mxu0 0.0
        %286 = vmatpush.msra.mxu0 0.0
        %287 = vmatpush.msra.mxu0 0.0
        %288 = vmatpush.msra.mxu0 0.0
        %289 = vmatpush.msra.mxu0 0.0
        %290 = vmatpush.msra.mxu0 0.0
        %291 = vmatpush.msra.mxu0 0.0
        %292 = vmatpush.msra.mxu0 0.0
        %293 = vmatpush.msra.mxu0 0.0
        %294 = vmatpush.msra.mxu0 %v206
        %295 = vmatpush.msra.mxu0 %v205
        %296 = vmatmul.f32.gmra.mxu0 %v278
        %v297 = vpop.f32.mrf.mxu0
        %v298 = vadd.f32 0.0, %v297
        %299 = vdwg.mxu0
        %vm300 = vcmask 64512
        %301 = vst.msk [vmem:[%s182] sm:$0xff] %vm300, %v229
        %302 = vst.msk [vmem:[%s182 + $0x8] sm:$0xff] %vm300, %v252
        %303 = vst.msk [vmem:[%s182 + $0x10] sm:$0xff] %vm300, %v275
        %304 = vst.msk [vmem:[%s182 + $0x18] sm:$0xff] %vm300, %v298
        %s305 = sand.u32 %s90, 1
        %s306 = scalar_lea.sflag [#allocation4], %s305
        %s307 = sand.u32 %s90, 1
        %s308 = smul.addr %s307, 32
        %s309 = scalar_lea.vmem [#allocation5], %s308
        // Predicated region
        $region33: #{tpu_custom_call.1} parent=27 // pred_check
          %p310 = pneg %p100
        $region34: #{tpu_custom_call.1} parent=27 // pred_check_branch
          %312 = sbr.rel (%p310) target = $region36
        $region35: #{tpu_custom_call.1} parent=27 // pred_region
          %s313 = smul.u32 4, %s23
          %315 = vsyncadd %s306, 0
          %s316 = sadd.s32 %s24, %s313
          %s317 = smul.addr %s316, 8
          %s318 = scalar_lea.hbm %s2, %s317
          %s319 = sshll.u32 %s309, 4
          %s320 = int_to_ptr.vmem [resolvable:$true] %s319
          %s321 = sshll.u32 %s318, 4
          %s322 = int_to_ptr.hbm [resolvable:$true] %s321
          %327 = dma.vmem_to_hbm [thread:$0]  %s320, 512, %s322, %s306, 128, 128, 8
        $region36: #{tpu_custom_call.1} parent=27 // pred_fallthru
          _
      $region28: #{tpu_custom_call.1} parent=5 // pred_fallthru
        _
      %p328 = scmp.le.s32.totalorder 2, %s14
      // Predicated region
      $region37: #{tpu_custom_call.1} parent=5 // pred_check
        %p329 = pneg %p328
      $region38: #{tpu_custom_call.1} parent=5 // pred_check_branch
        %331 = sbr.rel (%p329) target = $region40
      $region39: #{tpu_custom_call.1} parent=5 // pred_region
        %s332 = ssub.s32 %s14, 2
        // Predicated region
        $region41: #{tpu_custom_call.1} parent=39 // pred_check
          %p333 = pneg %p106
        $region42: #{tpu_custom_call.1} parent=39 // pred_check_branch
          %335 = sbr.rel (%p333) target = $region44
        $region43: #{tpu_custom_call.1} parent=39 // pred_region
          %s336 = sand.u32 %s91, 1
          %s337 = scalar_lea.sflag [#allocation4], %s336
          %s338 = sand.u32 %s91, 1
          %s339 = smul.addr %s338, 32
          %s340 = scalar_lea.vmem [#allocation5], %s339
          %342 = dma.done %s337, 512
        $region44: #{tpu_custom_call.1} parent=39 // pred_fallthru
          _
      $region40: #{tpu_custom_call.1} parent=5 // pred_fallthru
        _
    $region6: #{tpu_custom_call.1} parent=1 // loop_footer
      %s18 = sadd.s32 1, %s14
    $region7: #{tpu_custom_call.1} parent=1 // loop_footer_branch
      %13 = sbr.rel target = $region3
    $region8: #{tpu_custom_call.1} parent=1 // loop_exit
      _
    %343 = vsyncpa [#allocation3], 1
    %s344 = scalar_lea.sflag [#allocation3], 1
    %345 = vsyncpa %s344, 1
    %346 = vsyncpa [#allocation4], 1
    %s347 = scalar_lea.sflag [#allocation4], 1
    %348 = vsyncpa %s347, 1

</llo_original>
